<compile_context>
chip_gen: v5e
topology: v5e:2x2
jax: 0.10.0
libtpu: 0.0.40
codegen_flags: <defaults>
</compile_context>

<pallas_src>
import jax
import jax.numpy as jnp
from jax.experimental import pallas as pl
from jax.experimental.pallas import tpu as pltpu

SUBLANE = 8          # f32 sublane granularity (second-to-last dim)
FEATURE_ALIGN = 256  # MXU-facing K/N alignment (v6e/v7x 2x256x256 MXU)


def _round_up(n, m):
    return ((n + m - 1) // m) * m


# ----------------------------------------------------------------------------
# Fused Pallas kernel: relu(x.cast @ W1 + b1) @ W2 + b2   (f32 accumulation)
# ----------------------------------------------------------------------------
def _fused_mlp_kernel(x_ref, w1_ref, b1_ref, w2_ref, b2_ref, o_ref):
    # `layer(x.float())`: cast the incoming tile to the compute dtype
    # (f32 for the strict path, bf16 for the fast path).
    x = x_ref[...].astype(w1_ref.dtype)
    # Linear 1 on the MXU with f32 accumulation; bias + ReLU on the VPU.
    h = jnp.dot(x, w1_ref[...], preferred_element_type=jnp.float32)
    h = jnp.maximum(h + b1_ref[...], 0.0)
    # Linear 2 on the MXU (intermediate never leaves vregs/VMEM).
    h = h.astype(w2_ref.dtype)
    o = jnp.dot(h, w2_ref[...], preferred_element_type=jnp.float32)
    o_ref[...] = (o + b2_ref[...]).astype(o_ref.dtype)


# ----------------------------------------------------------------------------
# Single-buffering support probe for grid-invariant operands
# ----------------------------------------------------------------------------
_BUFFERED_1_SUPPORTED = None


def _single_buffer_weights_supported():
    """Probe once whether pipeline_mode=pl.Buffered(1) is accepted."""
    global _BUFFERED_1_SUPPORTED
    if _BUFFERED_1_SUPPORTED is None:
        try:
            def _probe(w_ref, o_ref):
                o_ref[...] = w_ref[...] + 1.0

            out = pl.pallas_call(
                _probe,
                out_shape=jax.ShapeDtypeStruct((16, 128), jnp.float32),
                grid=(2,),
                in_specs=[pl.BlockSpec((8, 128), lambda i: (0, 0),
                                       pipeline_mode=pl.Buffered(1))],
                out_specs=pl.BlockSpec((8, 128), lambda i: (i, 0)),
            )(jnp.ones((8, 128), jnp.float32))
            jax.block_until_ready(out)
            _BUFFERED_1_SUPPORTED = True
        except Exception:
            _BUFFERED_1_SUPPORTED = False
    return _BUFFERED_1_SUPPORTED


def _const_spec(shape, single_buffer):
    """BlockSpec for a grid-invariant (VMEM-resident) operand."""
    if single_buffer:
        return pl.BlockSpec(shape, lambda i: (0, 0),
                            pipeline_mode=pl.Buffered(1))
    return pl.BlockSpec(shape, lambda i: (0, 0))


# ----------------------------------------------------------------------------
# Fused MLP wrapper (weights arrive pre-padded / pre-cast from the layer)
# ----------------------------------------------------------------------------
def fused_mlp(x, w1_p, b1_p, w2_p, b2_p, *, out_features, tm=512):
    """x: [B, Din]; w1_p: [din_p, h_p] (compute dtype), b1_p: [1, h_p] f32,
    w2_p: [h_p, dout_p], b2_p: [1, dout_p] f32  ->  [B, out_features] f32."""
    B, Din = x.shape
    din_p, h_p = w1_p.shape
    dout_p = w2_p.shape[1]
    assert Din <= din_p and out_features <= dout_p

    # ---- batch tiling --------------------------------------------------
    b_aligned = _round_up(B, SUBLANE)
    tm = _round_up(max(SUBLANE, min(tm, b_aligned)), SUBLANE)
    # v7x megacore: prefer >= 2 parallel grid steps when the batch allows it.
    if b_aligned // tm < 2 and b_aligned >= 2 * SUBLANE:
        tm = _round_up(b_aligned // 2, SUBLANE)
    b_p = _round_up(b_aligned, tm)
    grid = (b_p // tm,)

    # ---- input padding only when actually misaligned --------------------
    if (b_p, din_p) == (B, Din):
        x_p = x
    else:
        x_p = jnp.zeros((b_p, din_p), x.dtype).at[:B, :Din].set(x)

    # ---- VMEM budget & cost hint ----------------------------------------
    w_bytes = (w1_p.size * w1_p.dtype.itemsize + w2_p.size * w2_p.dtype.itemsize
               + b1_p.size * b1_p.dtype.itemsize + b2_p.size * b2_p.dtype.itemsize)
    act_bytes = 2 * (tm * din_p * x_p.dtype.itemsize + tm * dout_p * 4)  # dbl-buffered
    need = 2 * w_bytes + act_bytes + (4 << 20)  # margin for compiler scratch
    vmem_limit = int(min(max(need, 32 << 20), 64 << 20))

    cost = pl.CostEstimate(
        flops=2 * b_p * (din_p * h_p + h_p * dout_p),
        transcendentals=0,
        bytes_accessed=int(x_p.size * x_p.dtype.itemsize + w_bytes
                           + b_p * dout_p * 4),
    )

    single_buffer = _single_buffer_weights_supported()

    out_p = pl.pallas_call(
        _fused_mlp_kernel,
        out_shape=jax.ShapeDtypeStruct((b_p, dout_p), jnp.float32),
        grid_spec=pltpu.PrefetchScalarGridSpec(
            num_scalar_prefetch=0,
            grid=grid,
            in_specs=[
                # x is tiled over the batch axis; weights/biases stay
                # VMEM-resident (same block every grid step, single-buffered).
                pl.BlockSpec((tm, din_p), lambda i: (i, 0)),
                _const_spec((din_p, h_p), single_buffer),
                _const_spec((1, h_p), single_buffer),
                _const_spec((h_p, dout_p), single_buffer),
                _const_spec((1, dout_p), single_buffer),
            ],
            out_specs=pl.BlockSpec((tm, dout_p), lambda i: (i, 0)),
        ),
        compiler_params=pltpu.CompilerParams(
            dimension_semantics=("parallel",),   # batch axis -> megacore on v7x
            vmem_limit_bytes=vmem_limit,
        ),
        cost_estimate=cost,
    )(x_p, w1_p, b1_p, w2_p, b2_p)

    if (b_p, dout_p) == (B, out_features):
        return out_p
    return out_p[:B, :out_features]


# ----------------------------------------------------------------------------
# Layer object: Linear -> ReLU -> Linear as one fused Pallas call
# ----------------------------------------------------------------------------
class FusedMLPLayer:
    """Equals Linear -> ReLU -> Linear of the original stack, executed as a
    single fused Pallas kernel.  compute_dtype=jnp.float32 matches the
    `.float()` contract exactly; jnp.bfloat16 is the fast MXU path with f32
    accumulation (accuracy switch)."""

    def __init__(self, key, in_features, hidden, out_features, *,
                 compute_dtype=jnp.float32, tm=512):
        k1w, k1b, k2w, k2b = jax.random.split(key, 4)
        bound1 = 1.0 / jnp.sqrt(jnp.float32(in_features))
        bound2 = 1.0 / jnp.sqrt(jnp.float32(hidden))
        # Un-padded f32 master weights (reference / checkpoint layout).
        self.w1 = jax.random.uniform(k1w, (in_features, hidden), jnp.float32,
                                     -bound1, bound1)
        self.b1 = jax.random.uniform(k1b, (1, hidden), jnp.float32,
                                     -bound1, bound1)
        self.w2 = jax.random.uniform(k2w, (hidden, out_features), jnp.float32,
                                     -bound2, bound2)
        self.b2 = jax.random.uniform(k2b, (1, out_features), jnp.float32,
                                     -bound2, bound2)

        # Pad (and optionally down-cast) ONCE at construction time.
        din_p = _round_up(in_features, FEATURE_ALIGN)
        h_p = _round_up(hidden, FEATURE_ALIGN)
        dout_p = _round_up(out_features, FEATURE_ALIGN)
        self.w1_p = jnp.zeros((din_p, h_p), compute_dtype).at[
            :in_features, :hidden].set(self.w1.astype(compute_dtype))
        self.b1_p = jnp.zeros((1, h_p), jnp.float32).at[:, :hidden].set(self.b1)
        self.w2_p = jnp.zeros((h_p, dout_p), compute_dtype).at[
            :hidden, :out_features].set(self.w2.astype(compute_dtype))
        self.b2_p = jnp.zeros((1, dout_p), jnp.float32).at[
            :, :out_features].set(self.b2)

        self.out_features = out_features
        self.tm = tm

    def __call__(self, x):
        return fused_mlp(x, self.w1_p, self.b1_p, self.w2_p, self.b2_p,
                         out_features=self.out_features, tm=self.tm)

    def to(self, *args, **kwargs):
        return self


# ----------------------------------------------------------------------------
# BaseNet: faithful port of the PyTorch module's control flow
# ----------------------------------------------------------------------------
class BaseNet:
    def __init__(self):
        self.layers = None

    def forward(self, x):
        if self.layers is None:
            raise NotImplementedError('You need to define layers!')
        for layer in self.layers:
            # `x.float()` is performed inside the Pallas kernel (in-kernel cast).
            x = layer(x)
        return x

    def __call__(self, x):
        return self.forward(x)

    def to(self, *args, **kwargs):
        # TODO(synk): torch .to() device/dtype movement has no JAX equivalent;
        # placement is handled by jit/device_put, so this is a no-op.
        if self.layers is not None:
            for layer in self.layers:
                layer.to(*args, **kwargs)
        return self


if __name__ == "__main__":
    key = jax.random.PRNGKey(0)
    k_x, k_mlp = jax.random.split(key)

    batch, hidden, out = 8, 32, 16

    # Abstract-base contract: forward with layers=None must raise.
    abstract_net = BaseNet()
    try:
        abstract_net(jnp.zeros((batch, hidden), jnp.float32))
        raise AssertionError("BaseNet with layers=None should have raised")
    except NotImplementedError:
        pass

    # Concrete instantiation: single fused Linear->ReLU->Linear layer.
    net = BaseNet()
    mlp = FusedMLPLayer(k_mlp, hidden, hidden, out)     # strict f32 path
    net.layers = [mlp]

    # Input in bfloat16 to exercise the in-kernel `.float()` cast semantics.
    x = jax.random.normal(k_x, (batch, hidden), dtype=jnp.bfloat16)

    y = jax.block_until_ready(net(x))

    # Reference in plain JAX (same math, f32 everywhere).
    ref = x.astype(jnp.float32)
    ref = jnp.maximum(ref @ mlp.w1 + mlp.b1, 0.0)
    ref = ref @ mlp.w2 + mlp.b2

    assert y.shape == (batch, out) and y.dtype == jnp.float32
    assert jnp.allclose(y, ref, atol=1e-5, rtol=1e-5)

    # Fast path: bf16 MXU with f32 accumulation (accuracy switch).
    net_fast = BaseNet()
    net_fast.layers = [FusedMLPLayer(k_mlp, hidden, hidden, out,
                                     compute_dtype=jnp.bfloat16)]
    y_fast = jax.block_until_ready(net_fast(x))
    assert y_fast.shape == (batch, out) and y_fast.dtype == jnp.float32
    assert jnp.allclose(y_fast, ref, atol=5e-2, rtol=5e-2)

    print("KERNEL_OK")
</pallas_src>

<mosaic_0001>
module attributes {stable_mosaic.version = 11 : i64} {
  func.func @_probe(%arg0: i32, %arg1: memref<8x128xf32, #tpu.memory_space<vmem>>, %arg2: memref<8x128xf32, #tpu.memory_space<vmem>>) attributes {dimension_semantics = [#tpu.dimension_semantics<arbitrary>], iteration_bounds = array<i64: 2>, scalar_prefetch = 0 : i64, scratch_operands = 0 : i64, tpu.core_type = #tpu.core_type<tc>, window_params = [{pipeline_mode = #tpu.pipeline_mode<synchronous>, transform_indices = @transform_0, window_bounds = array<i64: 8, 128>}, {transform_indices = @transform_1, window_bounds = array<i64: 8, 128>}]} {
    %c0 = arith.constant 0 : index
    %c0_0 = arith.constant 0 : index
    %0 = vector.load %arg1[%c0, %c0_0] : memref<8x128xf32, #tpu.memory_space<vmem>>, vector<8x128xf32>
    %cst = arith.constant 1.000000e+00 : f32
    %1 = vector.broadcast %cst : f32 to vector<8x128xf32>
    %2 = arith.addf %0, %1 : vector<8x128xf32>
    %c0_1 = arith.constant 0 : index
    %c0_2 = arith.constant 0 : index
    %3 = vector.load %arg2[%c0_1, %c0_2] : memref<8x128xf32, #tpu.memory_space<vmem>>, vector<8x128xf32>
    tpu.vector_store %arg2[%c0_1, %c0_2], %2 {strides = array<i32>} : memref<8x128xf32, #tpu.memory_space<vmem>>, vector<8x128xf32>,
    return
  }
  func.func @transform_0(%arg0: i32) -> (i32, i32) {
    %c0_i32 = arith.constant 0 : i32
    %c0_i32_0 = arith.constant 0 : i32
    %c0_i32_1 = arith.constant 0 : i32
    return %c0_i32, %c0_i32_0 : i32, i32
  }
  func.func @transform_1(%arg0: i32) -> (i32, i32) {
    %c0_i32 = arith.constant 0 : i32
    %c0_i32_0 = arith.constant 0 : i32
    return %arg0, %c0_i32 : i32, i32
  }
}

module attributes {stable_mosaic.version = 11 : i64} {
  func.func @_fused_mlp_kernel(%arg0: i32, %arg1: memref<8x256xbf16, #tpu.memory_space<vmem>>, %arg2: memref<256x256xf32, #tpu.memory_space<vmem>>, %arg3: memref<1x256xf32, #tpu.memory_space<vmem>>, %arg4: memref<256x256xf32, #tpu.memory_space<vmem>>, %arg5: memref<1x256xf32, #tpu.memory_space<vmem>>, %arg6: memref<8x256xf32, #tpu.memory_space<vmem>>) attributes {dimension_semantics = [#tpu.dimension_semantics<parallel>], iteration_bounds = array<i64: 1>, scalar_prefetch = 0 : i64, scratch_operands = 0 : i64, tpu.core_type = #tpu.core_type<tc>, window_params = [{transform_indices = @transform_0, window_bounds = array<i64: 8, 256>}, {pipeline_mode = #tpu.pipeline_mode<synchronous>, transform_indices = @transform_1, window_bounds = array<i64: 256, 256>}, {pipeline_mode = #tpu.pipeline_mode<synchronous>, transform_indices = @transform_2, window_bounds = array<i64: 1, 256>}, {pipeline_mode = #tpu.pipeline_mode<synchronous>, transform_indices = @transform_3, window_bounds = array<i64: 256, 256>}, {pipeline_mode = #tpu.pipeline_mode<synchronous>, transform_indices = @transform_4, window_bounds = array<i64: 1, 256>}, {transform_indices = @transform_5, window_bounds = array<i64: 8, 256>}]} {
    %c0 = arith.constant 0 : index
    %c0_0 = arith.constant 0 : index
    %0 = vector.load %arg1[%c0, %c0_0] : memref<8x256xbf16, #tpu.memory_space<vmem>>, vector<8x256xbf16>
    %1 = arith.extf %0 : vector<8x256xbf16> to vector<8x256xf32>
    %c0_1 = arith.constant 0 : index
    %c0_2 = arith.constant 0 : index
    %2 = vector.load %arg2[%c0_1, %c0_2] : memref<256x256xf32, #tpu.memory_space<vmem>>, vector<256x256xf32>
    %cst = arith.constant dense<0.000000e+00> : vector<8x256xf32>
    %3 = tpu.matmul %1, %2, %cst {dimension_numbers = #tpu.dot_dimension_numbers<[1], [0], [0], [1], [0, 0, 1, 1], [], []>} : vector<8x256xf32>, vector<256x256xf32>, vector<8x256xf32> -> vector<8x256xf32>
    %c0_3 = arith.constant 0 : index
    %c0_4 = arith.constant 0 : index
    %4 = vector.load %arg3[%c0_3, %c0_4] : memref<1x256xf32, #tpu.memory_space<vmem>>, vector<1x256xf32>
    %5 = vector.broadcast %4 : vector<1x256xf32> to vector<8x256xf32>
    %6 = arith.addf %3, %5 : vector<8x256xf32>
    %cst_5 = arith.constant 0.000000e+00 : f32
    %7 = vector.broadcast %cst_5 : f32 to vector<8x256xf32>
    %8 = arith.maximumf %6, %7 : vector<8x256xf32>
    %c0_6 = arith.constant 0 : index
    %c0_7 = arith.constant 0 : index
    %9 = vector.load %arg4[%c0_6, %c0_7] : memref<256x256xf32, #tpu.memory_space<vmem>>, vector<256x256xf32>
    %cst_8 = arith.constant dense<0.000000e+00> : vector<8x256xf32>
    %10 = tpu.matmul %8, %9, %cst_8 {dimension_numbers = #tpu.dot_dimension_numbers<[1], [0], [0], [1], [0, 0, 1, 1], [], []>} : vector<8x256xf32>, vector<256x256xf32>, vector<8x256xf32> -> vector<8x256xf32>
    %c0_9 = arith.constant 0 : index
    %c0_10 = arith.constant 0 : index
    %11 = vector.load %arg5[%c0_9, %c0_10] : memref<1x256xf32, #tpu.memory_space<vmem>>, vector<1x256xf32>
    %12 = vector.broadcast %11 : vector<1x256xf32> to vector<8x256xf32>
    %13 = arith.addf %10, %12 : vector<8x256xf32>
    %c0_11 = arith.constant 0 : index
    %c0_12 = arith.constant 0 : index
    %14 = vector.load %arg6[%c0_11, %c0_12] : memref<8x256xf32, #tpu.memory_space<vmem>>, vector<8x256xf32>
    tpu.vector_store %arg6[%c0_11, %c0_12], %13 {strides = array<i32>} : memref<8x256xf32, #tpu.memory_space<vmem>>, vector<8x256xf32>,
    return
  }
  func.func @transform_0(%arg0: i32) -> (i32, i32) {
    %c0_i32 = arith.constant 0 : i32
    %c0_i32_0 = arith.constant 0 : i32
    return %arg0, %c0_i32 : i32, i32
  }
  func.func @transform_1(%arg0: i32) -> (i32, i32) {
    %c0_i32 = arith.constant 0 : i32
    %c0_i32_0 = arith.constant 0 : i32
    %c0_i32_1 = arith.constant 0 : i32
    return %c0_i32, %c0_i32_0 : i32, i32
  }
  func.func @transform_2(%arg0: i32) -> (i32, i32) {
    %c0_i32 = arith.constant 0 : i32
    %c0_i32_0 = arith.constant 0 : i32
    %c0_i32_1 = arith.constant 0 : i32
    return %c0_i32, %c0_i32_0 : i32, i32
  }
  func.func @transform_3(%arg0: i32) -> (i32, i32) {
    %c0_i32 = arith.constant 0 : i32
    %c0_i32_0 = arith.constant 0 : i32
    %c0_i32_1 = arith.constant 0 : i32
    return %c0_i32, %c0_i32_0 : i32, i32
  }
  func.func @transform_4(%arg0: i32) -> (i32, i32) {
    %c0_i32 = arith.constant 0 : i32
    %c0_i32_0 = arith.constant 0 : i32
    %c0_i32_1 = arith.constant 0 : i32
    return %c0_i32, %c0_i32_0 : i32, i32
  }
  func.func @transform_5(%arg0: i32) -> (i32, i32) {
    %c0_i32 = arith.constant 0 : i32
    %c0_i32_0 = arith.constant 0 : i32
    return %arg0, %c0_i32 : i32, i32
  }
}

</mosaic_0001>

<llo_original>
// kernel: tpu_custom_call.1
$region0: #{tpu_custom_call.1}
  #allocation0 [shape = 'u32[]', space=smem, size = 0x4, offset = 0x4, fixed_abs, tag = 'smem constant byte address 0x4 - core index']
  #allocation1 [shape = 'u32[72,128]{1,0:T(1,128)}', space=vmem, size = 0x9000, scoped, tag = 'internal scratch']
  %s0 = inlined_call_operand.hbm [shape: f32[8,128], index: 0, kind: input, shape index: {}]
  %s1 = inlined_call_operand.hbm [shape: f32[16,128], index: 1, kind: output, shape index: {}]
  %s2 = sld [smem:[#allocation0]]
  $region41: #{tpu_custom_call.1} parent=0
    _
  %s4 = ssub.s32 1, %s2
  %s5 = scalar_select 0, %s4, %s2
  $region1: #{tpu_custom_call.1} parent=0
    #allocation2 [shape = 'u8[4096]{0}', space=vmem, size = 0x1000, scoped, tag = 'input window, operand 0, single buffered']
    #allocation3 [shape = 's32[2]{0}', space=sflag, size = 0x8, scoped, tag = 'scoped memory for tpu_custom_call.1']
    #allocation4 [shape = 's32[2]{0}', space=sflag, size = 0x8, scoped, tag = 'scoped memory for tpu_custom_call.1']
    #allocation5 [shape = 'u8[8192]{0}', space=vmem, size = 0x2000, scoped, tag = 'output window, operand 0']
    %6 = vsyncpa [#allocation3], 0
    %7 = vsyncpa [#allocation4], 0
    %s8 = scalar_lea.sflag [#allocation4], 1
    %9 = vsyncpa %s8, 0
    loop: start=0, step=1, limit=4
    $region2: #{tpu_custom_call.1} parent=1 // loop_pre_header
      _
    $region3: #{tpu_custom_call.1} parent=1 // loop_header
      %s11 = sphi 0, %s15
      %p12 = scmp.ge.s32.totalorder %s11, 4
      %s19 = sphi 0, %s19
      %s21 = sphi 0, %s19
      %s22 = sphi 0, %s21
      %s36 = sphi 0, %s22
      %s42 = sphi 0, %s44
      %s45 = sphi 0, %s42
      %s46 = sphi 0, %s45
      %s62 = sphi 0, %s46
    $region4: #{tpu_custom_call.1} parent=1 // loop_header_branch
      %14 = sbr.rel (%p12) target = $region8
    $region5: #{tpu_custom_call.1} parent=1 // loop_body
      %s16 = ssub.s32 %s11, 1
      %s17 = ssub.s32 %s11, 2
      %s18 = sadd.s32 %s11, 1
      %s20 = sadd.s32 %s19, 1
      %p23 = scmp.eq.s32.totalorder %s11, 1
      %p24 = scmp.ne.s32.totalorder %s19, %s21
      %p25 = scmp.eq.s32.totalorder %s11, 0
      %p26 = por %p24, %p25
      %p27 = scmp.ne.s32.totalorder %s19, %s21
      %p28 = scmp.eq.s32.totalorder %s16, 1
      %p29 = por %p27, %p28
      %p30 = scmp.ne.s32.totalorder %s21, %s22
      %p31 = scmp.eq.s32.totalorder %s16, 0
      %p32 = por %p30, %p31
      %p33 = scmp.ne.s32.totalorder %s21, %s22
      %p34 = scmp.eq.s32.totalorder %s17, 1
      %p35 = por %p33, %p34
      %p37 = scmp.ne.s32.totalorder %s22, %s36
      %p38 = scmp.eq.s32.totalorder %s17, 0
      %p39 = por %p37, %p38
      %s40 = ssub.s32 %s11, %s18
      %p41 = scmp.eq.s32.totalorder %s40, 0
      %s43 = sadd.s32 %s42, 1
      %s44 = scalar_select %p41, %s42, %s43
      %p47 = pneg %p41
      %p48 = scmp.eq.s32.totalorder %s11, 1
      %p49 = por %p47, %p48
      %p50 = scmp.ne.s32.totalorder %s42, %s45
      %p51 = scmp.eq.s32.totalorder %s11, 0
      %p52 = por %p50, %p51
      %p53 = scmp.ne.s32.totalorder %s42, %s45
      %p54 = scmp.eq.s32.totalorder %s16, 1
      %p55 = por %p53, %p54
      %p56 = scmp.ne.s32.totalorder %s45, %s46
      %p57 = scmp.eq.s32.totalorder %s16, 0
      %p58 = por %p56, %p57
      %p59 = scmp.ne.s32.totalorder %s45, %s46
      %p60 = scmp.eq.s32.totalorder %s17, 1
      %p61 = por %p59, %p60
      %p63 = scmp.ne.s32.totalorder %s46, %s62
      %p64 = scmp.eq.s32.totalorder %s17, 0
      %p65 = por %p63, %p64
      %p66 = scmp.le.s32.totalorder 1, %s11
      %p67 = scmp.lt.s32.totalorder %s11, 3
      %p68 = pnand %p66, %p67
      %p69 = pneg %p68
      // Predicated region
      $region9: #{tpu_custom_call.1} parent=5 // pred_check
        _
      $region10: #{tpu_custom_call.1} parent=5 // pred_check_branch
        %71 = sbr.rel (%p68) target = $region12
      $region11: #{tpu_custom_call.1} parent=5 // pred_region
        %s72 = ssub.s32 %s11, 1
        // Predicated region
        $region13: #{tpu_custom_call.1} parent=11 // pred_check
          %p73 = pneg %p32
        $region14: #{tpu_custom_call.1} parent=11 // pred_check_branch
          %75 = sbr.rel (%p73) target = $region16
        $region15: #{tpu_custom_call.1} parent=11 // pred_region
          %77 = vsyncadd [#allocation3], 0
          %s79 = sshll.u32 %s0, 4
          %s80 = int_to_ptr.hbm [resolvable:$true] %s79
          %s81 = sshll.u32 [#allocation2], 4
          %s82 = int_to_ptr.vmem [resolvable:$true] %s81
          %84 = dma.hbm_to_vmem [thread:$0]  %s80, 128, %s82, [#allocation3]
        $region16: #{tpu_custom_call.1} parent=11 // pred_fallthru
          _
      $region12: #{tpu_custom_call.1} parent=5 // pred_fallthru
        _
      %p85 = scmp.lt.s32.totalorder %s11, 2
      // Predicated region
      $region17: #{tpu_custom_call.1} parent=5 // pred_check
        %p86 = pneg %p85
      $region18: #{tpu_custom_call.1} parent=5 // pred_check_branch
        %88 = sbr.rel (%p86) target = $region20
      $region19: #{tpu_custom_call.1} parent=5 // pred_region
        _
      $region20: #{tpu_custom_call.1} parent=5 // pred_fallthru
        _
      %p89 = scmp.le.s32.totalorder 1, %s11
      %p90 = scmp.lt.s32.totalorder %s11, 3
      %p91 = pnand %p89, %p90
      %p92 = pneg %p91
      // Predicated region
      $region21: #{tpu_custom_call.1} parent=5 // pred_check
        _
      $region22: #{tpu_custom_call.1} parent=5 // pred_check_branch
        %94 = sbr.rel (%p91) target = $region24
      $region23: #{tpu_custom_call.1} parent=5 // pred_region
        %s95 = ssub.s32 %s11, 1
        // Predicated region
        $region25: #{tpu_custom_call.1} parent=23 // pred_check
          %p96 = pneg %p32
        $region26: #{tpu_custom_call.1} parent=23 // pred_check_branch
          %98 = sbr.rel (%p96) target = $region28
        $region27: #{tpu_custom_call.1} parent=23 // pred_region
          %100 = dma.done [#allocation3], 128
        $region28: #{tpu_custom_call.1} parent=23 // pred_fallthru
          _
        %p101 = pneg %p32
        %p102 = pneg %p29
        %p103 = pneg %p58
        %p104 = pneg %p55
        %s105 = sand.u32 %s45, 1
        %s106 = scalar_lea.sflag [#allocation4], %s105
        %s107 = sand.u32 %s45, 1
        %s108 = smul.addr %s107, 8
        %s109 = scalar_lea.vmem [#allocation5], %s108
        %v110 = vld [vmem:[#allocation2] sm:$0xff]
        %v111 = vadd.f32 %v110, 1.0
        %112 = vst [vmem:[%s109] sm:$0xff] %v111
        %s113 = sand.u32 %s45, 1
        %s114 = scalar_lea.sflag [#allocation4], %s113
        %s115 = sand.u32 %s45, 1
        %s116 = smul.addr %s115, 8
        %s117 = scalar_lea.vmem [#allocation5], %s116
        // Predicated region
        $region29: #{tpu_custom_call.1} parent=23 // pred_check
          %p118 = pneg %p55
        $region30: #{tpu_custom_call.1} parent=23 // pred_check_branch
          %120 = sbr.rel (%p118) target = $region32
        $region31: #{tpu_custom_call.1} parent=23 // pred_region
          %122 = vsyncadd %s114, 0
          %s123 = smul.addr %s16, 8
          %s124 = scalar_lea.hbm %s1, %s123
          %s126 = sshll.u32 %s117, 4
          %s127 = int_to_ptr.vmem [resolvable:$true] %s126
          %s128 = sshll.u32 %s124, 4
          %s129 = int_to_ptr.hbm [resolvable:$true] %s128
          %131 = dma.vmem_to_hbm [thread:$0]  %s127, 128, %s129, %s114
        $region32: #{tpu_custom_call.1} parent=23 // pred_fallthru
          _
      $region24: #{tpu_custom_call.1} parent=5 // pred_fallthru
        _
      %p132 = scmp.le.s32.totalorder 2, %s11
      // Predicated region
      $region33: #{tpu_custom_call.1} parent=5 // pred_check
        %p133 = pneg %p132
      $region34: #{tpu_custom_call.1} parent=5 // pred_check_branch
        %135 = sbr.rel (%p133) target = $region36
      $region35: #{tpu_custom_call.1} parent=5 // pred_region
        %s136 = ssub.s32 %s11, 2
        // Predicated region
        $region37: #{tpu_custom_call.1} parent=35 // pred_check
          %p137 = pneg %p61
        $region38: #{tpu_custom_call.1} parent=35 // pred_check_branch
          %139 = sbr.rel (%p137) target = $region40
        $region39: #{tpu_custom_call.1} parent=35 // pred_region
          %s140 = sand.u32 %s46, 1
          %s141 = scalar_lea.sflag [#allocation4], %s140
          %s142 = sand.u32 %s46, 1
          %s143 = smul.addr %s142, 8
          %s144 = scalar_lea.vmem [#allocation5], %s143
          %146 = dma.done %s141, 128
        $region40: #{tpu_custom_call.1} parent=35 // pred_fallthru
          _
      $region36: #{tpu_custom_call.1} parent=5 // pred_fallthru
        _
    $region6: #{tpu_custom_call.1} parent=1 // loop_footer
      %s15 = sadd.s32 1, %s11
    $region7: #{tpu_custom_call.1} parent=1 // loop_footer_branch
      %10 = sbr.rel target = $region3
    $region8: #{tpu_custom_call.1} parent=1 // loop_exit
      _
    %147 = vsyncpa [#allocation3], 1
    %s148 = scalar_lea.sflag [#allocation3], 1
    %149 = vsyncpa %s148, 1
    %150 = vsyncpa [#allocation4], 1
    %s151 = scalar_lea.sflag [#allocation4], 1
    %152 = vsyncpa %s151, 1

// kernel: tpu_custom_call.1
$region0: #{tpu_custom_call.1}
  #allocation0 [shape = 'u32[]', space=smem, size = 0x4, offset = 0x4, fixed_abs, tag = 'smem constant byte address 0x4 - core index']
  #allocation1 [shape = 'u32[72,128]{1,0:T(1,128)}', space=vmem, size = 0x9000, scoped, tag = 'internal scratch']
  %s0 = inlined_call_operand.hbm [shape: bf16[8,256], index: 0, kind: input, shape index: {}]
  %s1 = inlined_call_operand.hbm [shape: f32[256,256], index: 1, kind: input, shape index: {}]
  %s2 = inlined_call_operand.hbm [shape: f32[1,256], index: 2, kind: input, shape index: {}]
  %s3 = inlined_call_operand.hbm [shape: f32[256,256], index: 3, kind: input, shape index: {}]
  %s4 = inlined_call_operand.vmem [shape: f32[1,256], index: 4, kind: input, shape index: {}]
  %s5 = inlined_call_operand.hbm [shape: f32[8,256], index: 5, kind: output, shape index: {}]
  %s6 = sld [smem:[#allocation0]]
  $region46: #{tpu_custom_call.1} parent=0
    _
  %s8 = ssub.s32 1, %s6
  %s9 = scalar_select 0, %s8, %s6
  $region1: #{tpu_custom_call.1} parent=0
    #allocation2 [shape = 'u8[4096]{0}', space=vmem, size = 0x1000, scoped, tag = 'input window, operand 0, single buffered']
    #allocation3 [shape = 's32[1]{0}', space=sflag, size = 0x4, scoped, tag = 'scoped memory for tpu_custom_call.1']
    #allocation4 [shape = 's32[1]{0}', space=sflag, size = 0x4, scoped, tag = 'scoped memory for tpu_custom_call.1']
    #allocation5 [shape = 'u8[262144]{0}', space=vmem, size = 0x40000, scoped, tag = 'input window, operand 1, single buffered']
    #allocation6 [shape = 's32[1]{0}', space=sflag, size = 0x4, scoped, tag = 'scoped memory for tpu_custom_call.1']
    #allocation7 [shape = 'u8[1024]{0}', space=vmem, size = 0x400, scoped, tag = 'input window, operand 2, single buffered']
    #allocation8 [shape = 'u8[262144]{0}', space=vmem, size = 0x40000, scoped, tag = 'input window, operand 3, single buffered']
    #allocation9 [shape = 's32[1]{0}', space=sflag, size = 0x4, scoped, tag = 'scoped memory for tpu_custom_call.1']
    #allocation10 [shape = 'u8[8192]{0}', space=vmem, size = 0x2000, scoped, tag = 'output window, operand 0, single buffered']
    %10 = vsyncpa [#allocation3], 0
    %11 = vsyncpa [#allocation6], 0
    %12 = vsyncpa [#allocation9], 0
    %13 = vsyncpa [#allocation4], 0
    // Predicated region
    $region2: #{tpu_custom_call.1} parent=1 // pred_check
      _
    $region3: #{tpu_custom_call.1} parent=1 // pred_check_branch
      %15 = sbr.rel (0) target = $region5
    $region4: #{tpu_custom_call.1} parent=1 // pred_region
      %17 = vsyncadd [#allocation3], 0
      %s19 = sshll.u32 %s0, 4
      %s20 = int_to_ptr.hbm [resolvable:$true] %s19
      %s21 = sshll.u32 [#allocation2], 4
      %s22 = int_to_ptr.vmem [resolvable:$true] %s21
      %24 = dma.hbm_to_vmem [thread:$0]  %s20, 128, %s22, [#allocation3]
    $region5: #{tpu_custom_call.1} parent=1 // pred_fallthru
      _
    // Predicated region
    $region6: #{tpu_custom_call.1} parent=1 // pred_check
      _
    $region7: #{tpu_custom_call.1} parent=1 // pred_check_branch
      %26 = sbr.rel (0) target = $region9
    $region8: #{tpu_custom_call.1} parent=1 // pred_region
      %28 = vsyncadd [#allocation6], 0
      %s29 = sshll.u32 %s1, 4
      %s30 = int_to_ptr.hbm [resolvable:$true] %s29
      %s31 = sshll.u32 [#allocation5], 4
      %s32 = int_to_ptr.vmem [resolvable:$true] %s31
      %37 = dma.hbm_to_vmem [thread:$0]  %s30, 8192, %s32, [#allocation6], 256, 256, 16
    $region9: #{tpu_custom_call.1} parent=1 // pred_fallthru
      _
    // Predicated region
    $region10: #{tpu_custom_call.1} parent=1 // pred_check
      _
    $region11: #{tpu_custom_call.1} parent=1 // pred_check_branch
      %39 = sbr.rel (0) target = $region13
    $region12: #{tpu_custom_call.1} parent=1 // pred_region
      %41 = vsyncadd [#allocation6], 0
      %s43 = sshll.u32 %s2, 4
      %s44 = int_to_ptr.hbm [resolvable:$true] %s43
      %s45 = sshll.u32 [#allocation7], 4
      %s46 = int_to_ptr.vmem [resolvable:$true] %s45
      %48 = dma.hbm_to_vmem [thread:$0]  %s44, 32, %s46, [#allocation6]
    $region13: #{tpu_custom_call.1} parent=1 // pred_fallthru
      _
    // Predicated region
    $region14: #{tpu_custom_call.1} parent=1 // pred_check
      _
    $region15: #{tpu_custom_call.1} parent=1 // pred_check_branch
      %50 = sbr.rel (0) target = $region17
    $region16: #{tpu_custom_call.1} parent=1 // pred_region
      %52 = vsyncadd [#allocation9], 0
      %s53 = sshll.u32 %s3, 4
      %s54 = int_to_ptr.hbm [resolvable:$true] %s53
      %s55 = sshll.u32 [#allocation8], 4
      %s56 = int_to_ptr.vmem [resolvable:$true] %s55
      %61 = dma.hbm_to_vmem [thread:$0]  %s54, 8192, %s56, [#allocation9], 256, 256, 16
    $region17: #{tpu_custom_call.1} parent=1 // pred_fallthru
      _
    // Predicated region
    $region18: #{tpu_custom_call.1} parent=1 // pred_check
      _
    $region19: #{tpu_custom_call.1} parent=1 // pred_check_branch
      %63 = sbr.rel (0) target = $region21
    $region20: #{tpu_custom_call.1} parent=1 // pred_region
      _
    $region21: #{tpu_custom_call.1} parent=1 // pred_fallthru
      _
    // Predicated region
    $region22: #{tpu_custom_call.1} parent=1 // pred_check
      _
    $region23: #{tpu_custom_call.1} parent=1 // pred_check_branch
      %65 = sbr.rel (0) target = $region25
    $region24: #{tpu_custom_call.1} parent=1 // pred_region
      %67 = dma.done [#allocation3], 128
    $region25: #{tpu_custom_call.1} parent=1 // pred_fallthru
      _
    // Predicated region
    $region26: #{tpu_custom_call.1} parent=1 // pred_check
      _
    $region27: #{tpu_custom_call.1} parent=1 // pred_check_branch
      %69 = sbr.rel (0) target = $region29
    $region28: #{tpu_custom_call.1} parent=1 // pred_region
      %71 = dma.done [#allocation6], 8192
    $region29: #{tpu_custom_call.1} parent=1 // pred_fallthru
      _
    // Predicated region
    $region30: #{tpu_custom_call.1} parent=1 // pred_check
      _
    $region31: #{tpu_custom_call.1} parent=1 // pred_check_branch
      %73 = sbr.rel (0) target = $region33
    $region32: #{tpu_custom_call.1} parent=1 // pred_region
      %75 = dma.done [#allocation6], 32
    $region33: #{tpu_custom_call.1} parent=1 // pred_fallthru
      _
    // Predicated region
    $region34: #{tpu_custom_call.1} parent=1 // pred_check
      _
    $region35: #{tpu_custom_call.1} parent=1 // pred_check_branch
      %77 = sbr.rel (0) target = $region37
    $region36: #{tpu_custom_call.1} parent=1 // pred_region
      %79 = dma.done [#allocation9], 8192
    $region37: #{tpu_custom_call.1} parent=1 // pred_fallthru
      _
    %v80 = vld [vmem:[#allocation2] sm:$0xff]
    %v81 = vunpack.c.l.bf16 %v80
    %v82 = vunpack.c.h.bf16 %v80
    %v83 = vld [vmem:[#allocation5] sm:$0xff]
    %v84 = vld [vmem:[#allocation5 + $0x8] sm:$0xff]
    %v85 = vld [vmem:[#allocation5 + $0x10] sm:$0xff]
    %v86 = vld [vmem:[#allocation5 + $0x18] sm:$0xff]
    %v87 = vld [vmem:[#allocation5 + $0x20] sm:$0xff]
    %v88 = vld [vmem:[#allocation5 + $0x28] sm:$0xff]
    %v89 = vld [vmem:[#allocation5 + $0x30] sm:$0xff]
    %v90 = vld [vmem:[#allocation5 + $0x38] sm:$0xff]
    %v91 = vld [vmem:[#allocation5 + $0x40] sm:$0xff]
    %v92 = vld [vmem:[#allocation5 + $0x48] sm:$0xff]
    %v93 = vld [vmem:[#allocation5 + $0x50] sm:$0xff]
    %v94 = vld [vmem:[#allocation5 + $0x58] sm:$0xff]
    %v95 = vld [vmem:[#allocation5 + $0x60] sm:$0xff]
    %v96 = vld [vmem:[#allocation5 + $0x68] sm:$0xff]
    %v97 = vld [vmem:[#allocation5 + $0x70] sm:$0xff]
    %v98 = vld [vmem:[#allocation5 + $0x78] sm:$0xff]
    %v99 = vld [vmem:[#allocation5 + $0x80] sm:$0xff]
    %v100 = vld [vmem:[#allocation5 + $0x88] sm:$0xff]
    %v101 = vld [vmem:[#allocation5 + $0x90] sm:$0xff]
    %v102 = vld [vmem:[#allocation5 + $0x98] sm:$0xff]
    %v103 = vld [vmem:[#allocation5 + $0xa0] sm:$0xff]
    %v104 = vld [vmem:[#allocation5 + $0xa8] sm:$0xff]
    %v105 = vld [vmem:[#allocation5 + $0xb0] sm:$0xff]
    %v106 = vld [vmem:[#allocation5 + $0xb8] sm:$0xff]
    %v107 = vld [vmem:[#allocation5 + $0xc0] sm:$0xff]
    %v108 = vld [vmem:[#allocation5 + $0xc8] sm:$0xff]
    %v109 = vld [vmem:[#allocation5 + $0xd0] sm:$0xff]
    %v110 = vld [vmem:[#allocation5 + $0xd8] sm:$0xff]
    %v111 = vld [vmem:[#allocation5 + $0xe0] sm:$0xff]
    %v112 = vld [vmem:[#allocation5 + $0xe8] sm:$0xff]
    %v113 = vld [vmem:[#allocation5 + $0xf0] sm:$0xff]
    %v114 = vld [vmem:[#allocation5 + $0xf8] sm:$0xff]
    %v115 = vld [vmem:[#allocation5 + $0x100] sm:$0xff]
    %v116 = vld [vmem:[#allocation5 + $0x108] sm:$0xff]
    %v117 = vld [vmem:[#allocation5 + $0x110] sm:$0xff]
    %v118 = vld [vmem:[#allocation5 + $0x118] sm:$0xff]
    %v119 = vld [vmem:[#allocation5 + $0x120] sm:$0xff]
    %v120 = vld [vmem:[#allocation5 + $0x128] sm:$0xff]
    %v121 = vld [vmem:[#allocation5 + $0x130] sm:$0xff]
    %v122 = vld [vmem:[#allocation5 + $0x138] sm:$0xff]
    %v123 = vld [vmem:[#allocation5 + $0x140] sm:$0xff]
    %v124 = vld [vmem:[#allocation5 + $0x148] sm:$0xff]
    %v125 = vld [vmem:[#allocation5 + $0x150] sm:$0xff]
    %v126 = vld [vmem:[#allocation5 + $0x158] sm:$0xff]
    %v127 = vld [vmem:[#allocation5 + $0x160] sm:$0xff]
    %v128 = vld [vmem:[#allocation5 + $0x168] sm:$0xff]
    %v129 = vld [vmem:[#allocation5 + $0x170] sm:$0xff]
    %v130 = vld [vmem:[#allocation5 + $0x178] sm:$0xff]
    %v131 = vld [vmem:[#allocation5 + $0x180] sm:$0xff]
    %v132 = vld [vmem:[#allocation5 + $0x188] sm:$0xff]
    %v133 = vld [vmem:[#allocation5 + $0x190] sm:$0xff]
    %v134 = vld [vmem:[#allocation5 + $0x198] sm:$0xff]
    %v135 = vld [vmem:[#allocation5 + $0x1a0] sm:$0xff]
    %v136 = vld [vmem:[#allocation5 + $0x1a8] sm:$0xff]
    %v137 = vld [vmem:[#allocation5 + $0x1b0] sm:$0xff]
    %v138 = vld [vmem:[#allocation5 + $0x1b8] sm:$0xff]
    %v139 = vld [vmem:[#allocation5 + $0x1c0] sm:$0xff]
    %v140 = vld [vmem:[#allocation5 + $0x1c8] sm:$0xff]
    %v141 = vld [vmem:[#allocation5 + $0x1d0] sm:$0xff]
    %v142 = vld [vmem:[#allocation5 + $0x1d8] sm:$0xff]
    %v143 = vld [vmem:[#allocation5 + $0x1e0] sm:$0xff]
    %v144 = vld [vmem:[#allocation5 + $0x1e8] sm:$0xff]
    %v145 = vld [vmem:[#allocation5 + $0x1f0] sm:$0xff]
    %v146 = vld [vmem:[#allocation5 + $0x1f8] sm:$0xff]
    %v147 = vld [vmem:[#allocation7] sm:$0x3]
    %v149 = vperm.slane %v147, 0
    %v150 = vperm.slane %v147, 1
    %153 = vmatpush.msra.mxu0 %v113
    %154 = vmatpush.msra.mxu0 %v111
    %155 = vmatpush.msra.mxu0 %v109
    %156 = vmatpush.msra.mxu0 %v107
    %157 = vmatpush.msra.mxu0 %v105
    %158 = vmatpush.msra.mxu0 %v103
    %159 = vmatpush.msra.mxu0 %v101
    %160 = vmatpush.msra.mxu0 %v99
    %161 = vmatpush.msra.mxu0 %v97
    %162 = vmatpush.msra.mxu0 %v95
    %163 = vmatpush.msra.mxu0 %v93
    %164 = vmatpush.msra.mxu0 %v91
    %165 = vmatpush.msra.mxu0 %v89
    %166 = vmatpush.msra.mxu0 %v87
    %167 = vmatpush.msra.mxu0 %v85
    %168 = vmatpush.msra.mxu0 %v83
    %169 = vmatmul.f32.gmra.mxu0 %v81
    %v170 = vpop.f32.mrf.mxu0
    %v171 = vadd.f32 %v149, %v170
    %172 = vdwg.mxu0
    %173 = vmatpush.msra.mxu0 %v145
    %174 = vmatpush.msra.mxu0 %v143
    %175 = vmatpush.msra.mxu0 %v141
    %176 = vmatpush.msra.mxu0 %v139
    %177 = vmatpush.msra.mxu0 %v137
    %178 = vmatpush.msra.mxu0 %v135
    %179 = vmatpush.msra.mxu0 %v133
    %180 = vmatpush.msra.mxu0 %v131
    %181 = vmatpush.msra.mxu0 %v129
    %182 = vmatpush.msra.mxu0 %v127
    %183 = vmatpush.msra.mxu0 %v125
    %184 = vmatpush.msra.mxu0 %v123
    %185 = vmatpush.msra.mxu0 %v121
    %186 = vmatpush.msra.mxu0 %v119
    %187 = vmatpush.msra.mxu0 %v117
    %188 = vmatpush.msra.mxu0 %v115
    %189 = vmatmul.f32.gmra.mxu0 %v82
    %v190 = vpop.f32.mrf.mxu0
    %v191 = vadd.f32 %v171, %v190
    %192 = vdwg.mxu0
    %193 = vmatpush.msra.mxu0 %v114
    %194 = vmatpush.msra.mxu0 %v112
    %195 = vmatpush.msra.mxu0 %v110
    %196 = vmatpush.msra.mxu0 %v108
    %197 = vmatpush.msra.mxu0 %v106
    %198 = vmatpush.msra.mxu0 %v104
    %199 = vmatpush.msra.mxu0 %v102
    %200 = vmatpush.msra.mxu0 %v100
    %201 = vmatpush.msra.mxu0 %v98
    %202 = vmatpush.msra.mxu0 %v96
    %203 = vmatpush.msra.mxu0 %v94
    %204 = vmatpush.msra.mxu0 %v92
    %205 = vmatpush.msra.mxu0 %v90
    %206 = vmatpush.msra.mxu0 %v88
    %207 = vmatpush.msra.mxu0 %v86
    %208 = vmatpush.msra.mxu0 %v84
    %209 = vmatmul.f32.gmra.mxu0 %v81
    %v210 = vpop.f32.mrf.mxu0
    %v211 = vadd.f32 %v150, %v210
    %212 = vdwg.mxu0
    %213 = vmatpush.msra.mxu0 %v146
    %214 = vmatpush.msra.mxu0 %v144
    %215 = vmatpush.msra.mxu0 %v142
    %216 = vmatpush.msra.mxu0 %v140
    %217 = vmatpush.msra.mxu0 %v138
    %218 = vmatpush.msra.mxu0 %v136
    %219 = vmatpush.msra.mxu0 %v134
    %220 = vmatpush.msra.mxu0 %v132
    %221 = vmatpush.msra.mxu0 %v130
    %222 = vmatpush.msra.mxu0 %v128
    %223 = vmatpush.msra.mxu0 %v126
    %224 = vmatpush.msra.mxu0 %v124
    %225 = vmatpush.msra.mxu0 %v122
    %226 = vmatpush.msra.mxu0 %v120
    %227 = vmatpush.msra.mxu0 %v118
    %228 = vmatpush.msra.mxu0 %v116
    %229 = vmatmul.f32.gmra.mxu0 %v82
    %v230 = vpop.f32.mrf.mxu0
    %v231 = vadd.f32 %v211, %v230
    %232 = vdwg.mxu0
    %v233 = vmax.f32 %v191, 0.0
    %v234 = vmax.f32 %v231, 0.0
    %v235 = vld [vmem:[#allocation8] sm:$0xff]
    %v236 = vld [vmem:[#allocation8 + $0x8] sm:$0xff]
    %v237 = vld [vmem:[#allocation8 + $0x10] sm:$0xff]
    %v238 = vld [vmem:[#allocation8 + $0x18] sm:$0xff]
    %v239 = vld [vmem:[#allocation8 + $0x20] sm:$0xff]
    %v240 = vld [vmem:[#allocation8 + $0x28] sm:$0xff]
    %v241 = vld [vmem:[#allocation8 + $0x30] sm:$0xff]
    %v242 = vld [vmem:[#allocation8 + $0x38] sm:$0xff]
    %v243 = vld [vmem:[#allocation8 + $0x40] sm:$0xff]
    %v244 = vld [vmem:[#allocation8 + $0x48] sm:$0xff]
    %v245 = vld [vmem:[#allocation8 + $0x50] sm:$0xff]
    %v246 = vld [vmem:[#allocation8 + $0x58] sm:$0xff]
    %v247 = vld [vmem:[#allocation8 + $0x60] sm:$0xff]
    %v248 = vld [vmem:[#allocation8 + $0x68] sm:$0xff]
    %v249 = vld [vmem:[#allocation8 + $0x70] sm:$0xff]
    %v250 = vld [vmem:[#allocation8 + $0x78] sm:$0xff]
    %v251 = vld [vmem:[#allocation8 + $0x80] sm:$0xff]
    %v252 = vld [vmem:[#allocation8 + $0x88] sm:$0xff]
    %v253 = vld [vmem:[#allocation8 + $0x90] sm:$0xff]
    %v254 = vld [vmem:[#allocation8 + $0x98] sm:$0xff]
    %v255 = vld [vmem:[#allocation8 + $0xa0] sm:$0xff]
    %v256 = vld [vmem:[#allocation8 + $0xa8] sm:$0xff]
    %v257 = vld [vmem:[#allocation8 + $0xb0] sm:$0xff]
    %v258 = vld [vmem:[#allocation8 + $0xb8] sm:$0xff]
    %v259 = vld [vmem:[#allocation8 + $0xc0] sm:$0xff]
    %v260 = vld [vmem:[#allocation8 + $0xc8] sm:$0xff]
    %v261 = vld [vmem:[#allocation8 + $0xd0] sm:$0xff]
    %v262 = vld [vmem:[#allocation8 + $0xd8] sm:$0xff]
    %v263 = vld [vmem:[#allocation8 + $0xe0] sm:$0xff]
    %v264 = vld [vmem:[#allocation8 + $0xe8] sm:$0xff]
    %v265 = vld [vmem:[#allocation8 + $0xf0] sm:$0xff]
    %v266 = vld [vmem:[#allocation8 + $0xf8] sm:$0xff]
    %v267 = vld [vmem:[#allocation8 + $0x100] sm:$0xff]
    %v268 = vld [vmem:[#allocation8 + $0x108] sm:$0xff]
    %v269 = vld [vmem:[#allocation8 + $0x110] sm:$0xff]
    %v270 = vld [vmem:[#allocation8 + $0x118] sm:$0xff]
    %v271 = vld [vmem:[#allocation8 + $0x120] sm:$0xff]
    %v272 = vld [vmem:[#allocation8 + $0x128] sm:$0xff]
    %v273 = vld [vmem:[#allocation8 + $0x130] sm:$0xff]
    %v274 = vld [vmem:[#allocation8 + $0x138] sm:$0xff]
    %v275 = vld [vmem:[#allocation8 + $0x140] sm:$0xff]
    %v276 = vld [vmem:[#allocation8 + $0x148] sm:$0xff]
    %v277 = vld [vmem:[#allocation8 + $0x150] sm:$0xff]
    %v278 = vld [vmem:[#allocation8 + $0x158] sm:$0xff]
    %v279 = vld [vmem:[#allocation8 + $0x160] sm:$0xff]
    %v280 = vld [vmem:[#allocation8 + $0x168] sm:$0xff]
    %v281 = vld [vmem:[#allocation8 + $0x170] sm:$0xff]
    %v282 = vld [vmem:[#allocation8 + $0x178] sm:$0xff]
    %v283 = vld [vmem:[#allocation8 + $0x180] sm:$0xff]
    %v284 = vld [vmem:[#allocation8 + $0x188] sm:$0xff]
    %v285 = vld [vmem:[#allocation8 + $0x190] sm:$0xff]
    %v286 = vld [vmem:[#allocation8 + $0x198] sm:$0xff]
    %v287 = vld [vmem:[#allocation8 + $0x1a0] sm:$0xff]
    %v288 = vld [vmem:[#allocation8 + $0x1a8] sm:$0xff]
    %v289 = vld [vmem:[#allocation8 + $0x1b0] sm:$0xff]
    %v290 = vld [vmem:[#allocation8 + $0x1b8] sm:$0xff]
    %v291 = vld [vmem:[#allocation8 + $0x1c0] sm:$0xff]
    %v292 = vld [vmem:[#allocation8 + $0x1c8] sm:$0xff]
    %v293 = vld [vmem:[#allocation8 + $0x1d0] sm:$0xff]
    %v294 = vld [vmem:[#allocation8 + $0x1d8] sm:$0xff]
    %v295 = vld [vmem:[#allocation8 + $0x1e0] sm:$0xff]
    %v296 = vld [vmem:[#allocation8 + $0x1e8] sm:$0xff]
    %v297 = vld [vmem:[#allocation8 + $0x1f0] sm:$0xff]
    %v298 = vld [vmem:[#allocation8 + $0x1f8] sm:$0xff]
    %v299 = vld [vmem:[%s4] sm:$0x3]
    %v301 = vperm.slane %v299, 0
    %v302 = vperm.slane %v299, 1
    %305 = vmatpush.msra.mxu0 %v265
    %306 = vmatpush.msra.mxu0 %v263
    %307 = vmatpush.msra.mxu0 %v261
    %308 = vmatpush.msra.mxu0 %v259
    %309 = vmatpush.msra.mxu0 %v257
    %310 = vmatpush.msra.mxu0 %v255
    %311 = vmatpush.msra.mxu0 %v253
    %312 = vmatpush.msra.mxu0 %v251
    %313 = vmatpush.msra.mxu0 %v249
    %314 = vmatpush.msra.mxu0 %v247
    %315 = vmatpush.msra.mxu0 %v245
    %316 = vmatpush.msra.mxu0 %v243
    %317 = vmatpush.msra.mxu0 %v241
    %318 = vmatpush.msra.mxu0 %v239
    %319 = vmatpush.msra.mxu0 %v237
    %320 = vmatpush.msra.mxu0 %v235
    %321 = vmatmul.f32.gmra.mxu0 %v233
    %v322 = vpop.f32.mrf.mxu0
    %v323 = vadd.f32 %v301, %v322
    %324 = vdwg.mxu0
    %325 = vmatpush.msra.mxu0 %v297
    %326 = vmatpush.msra.mxu0 %v295
    %327 = vmatpush.msra.mxu0 %v293
    %328 = vmatpush.msra.mxu0 %v291
    %329 = vmatpush.msra.mxu0 %v289
    %330 = vmatpush.msra.mxu0 %v287
    %331 = vmatpush.msra.mxu0 %v285
    %332 = vmatpush.msra.mxu0 %v283
    %333 = vmatpush.msra.mxu0 %v281
    %334 = vmatpush.msra.mxu0 %v279
    %335 = vmatpush.msra.mxu0 %v277
    %336 = vmatpush.msra.mxu0 %v275
    %337 = vmatpush.msra.mxu0 %v273
    %338 = vmatpush.msra.mxu0 %v271
    %339 = vmatpush.msra.mxu0 %v269
    %340 = vmatpush.msra.mxu0 %v267
    %341 = vmatmul.f32.gmra.mxu0 %v234
    %v342 = vpop.f32.mrf.mxu0
    %v343 = vadd.f32 %v323, %v342
    %344 = vdwg.mxu0
    %345 = vmatpush.msra.mxu0 %v266
    %346 = vmatpush.msra.mxu0 %v264
    %347 = vmatpush.msra.mxu0 %v262
    %348 = vmatpush.msra.mxu0 %v260
    %349 = vmatpush.msra.mxu0 %v258
    %350 = vmatpush.msra.mxu0 %v256
    %351 = vmatpush.msra.mxu0 %v254
    %352 = vmatpush.msra.mxu0 %v252
    %353 = vmatpush.msra.mxu0 %v250
    %354 = vmatpush.msra.mxu0 %v248
    %355 = vmatpush.msra.mxu0 %v246
    %356 = vmatpush.msra.mxu0 %v244
    %357 = vmatpush.msra.mxu0 %v242
    %358 = vmatpush.msra.mxu0 %v240
    %359 = vmatpush.msra.mxu0 %v238
    %360 = vmatpush.msra.mxu0 %v236
    %361 = vmatmul.f32.gmra.mxu0 %v233
    %v362 = vpop.f32.mrf.mxu0
    %v363 = vadd.f32 %v302, %v362
    %364 = vdwg.mxu0
    %365 = vmatpush.msra.mxu0 %v298
    %366 = vmatpush.msra.mxu0 %v296
    %367 = vmatpush.msra.mxu0 %v294
    %368 = vmatpush.msra.mxu0 %v292
    %369 = vmatpush.msra.mxu0 %v290
    %370 = vmatpush.msra.mxu0 %v288
    %371 = vmatpush.msra.mxu0 %v286
    %372 = vmatpush.msra.mxu0 %v284
    %373 = vmatpush.msra.mxu0 %v282
    %374 = vmatpush.msra.mxu0 %v280
    %375 = vmatpush.msra.mxu0 %v278
    %376 = vmatpush.msra.mxu0 %v276
    %377 = vmatpush.msra.mxu0 %v274
    %378 = vmatpush.msra.mxu0 %v272
    %379 = vmatpush.msra.mxu0 %v270
    %380 = vmatpush.msra.mxu0 %v268
    %381 = vmatmul.f32.gmra.mxu0 %v234
    %v382 = vpop.f32.mrf.mxu0
    %v383 = vadd.f32 %v363, %v382
    %384 = vdwg.mxu0
    %385 = vst [vmem:[#allocation10] sm:$0xff] %v343
    %386 = vst [vmem:[#allocation10 + $0x8] sm:$0xff] %v383
    // Predicated region
    $region38: #{tpu_custom_call.1} parent=1 // pred_check
      _
    $region39: #{tpu_custom_call.1} parent=1 // pred_check_branch
      %388 = sbr.rel (0) target = $region41
    $region40: #{tpu_custom_call.1} parent=1 // pred_region
      %390 = vsyncadd [#allocation4], 0
      %s392 = sshll.u32 [#allocation10], 4
      %s393 = int_to_ptr.vmem [resolvable:$true] %s392
      %s394 = sshll.u32 %s5, 4
      %s395 = int_to_ptr.hbm [resolvable:$true] %s394
      %397 = dma.vmem_to_hbm [thread:$0]  %s393, 256, %s395, [#allocation4]
    $region41: #{tpu_custom_call.1} parent=1 // pred_fallthru
      _
    // Predicated region
    $region42: #{tpu_custom_call.1} parent=1 // pred_check
      _
    $region43: #{tpu_custom_call.1} parent=1 // pred_check_branch
      %399 = sbr.rel (0) target = $region45
    $region44: #{tpu_custom_call.1} parent=1 // pred_region
      %401 = dma.done [#allocation4], 256
    $region45: #{tpu_custom_call.1} parent=1 // pred_fallthru
      _
    %402 = vsyncpa [#allocation3], 1
    %403 = vsyncpa [#allocation6], 1
    %404 = vsyncpa [#allocation9], 1
    %405 = vsyncpa [#allocation4], 1

</llo_original>
